<compile_context>
chip_gen: v7x
topology: tpu7x:2x2x1
jax: 0.10.0
libtpu: 0.0.40
codegen_flags: <defaults>
</compile_context>

<pallas_src>
import jax
import jax.numpy as jnp
from jax.experimental import pallas as pl
from jax.experimental.pallas import tpu as pltpu

KERNEL_SIZE = 25                    # series_decomp kernel_size
PAD = (KERNEL_SIZE - 1) // 2        # replicate padding = 12
N_OPS = 6                           # size of the FuncPool (len(flist))


def _mixed_func(z, w_ref):
    """Weighted sum over the elementwise function pool.  w_ref is SMEM (N_OPS,).

    exp(z) is computed once and reused for both the sigmoid and exp entries
    (2 EUP transcendentals per branch instead of 3).
    """
    e = jnp.exp(z)
    out = w_ref[0] * z                           # identity
    out = out + w_ref[1] * (z * z)               # square
    out = out + w_ref[2] * jnp.tanh(z)           # tanh
    out = out + w_ref[3] * (e / (1.0 + e))       # sigmoid (shared exp)
    out = out + w_ref[4] * jnp.maximum(z, 0.0)   # relu
    out = out + w_ref[5] * e                     # exp (shared)
    return out


def _dfn_kernel(ws_ref, wt_ref, a_ref, x_ref, out_ref):
    # ws_ref / wt_ref : SMEM (N_OPS,)      combined mixed-op weights
    # a_ref           : VMEM (L, L)        banded averaging matrix (padding baked in)
    # x_ref           : VMEM (L, tile_n)   lane-dense input block (time x batch*chan)
    # out_ref         : VMEM (L, tile_n)   final output block
    x = x_ref[...].astype(jnp.float32)

    # --- series decomposition on the MXU: trend = A @ x ----------------------
    trend = jnp.dot(a_ref[...], x, preferred_element_type=jnp.float32)
    seasonal = x - trend

    # --- mixed functions on seasonal / trend branches, then sum --------------
    out = _mixed_func(seasonal, ws_ref) + _mixed_func(trend, wt_ref)
    out_ref[...] = out.astype(out_ref.dtype)


def _avg_matrix(L):
    """(L, L) matrix computing the replicate-padded 25-tap moving average."""
    k = jnp.arange(KERNEL_SIZE)
    # padded index i+k maps to original index clip(i + k - PAD, 0, L-1)
    src = jnp.clip(jnp.arange(L)[:, None] + k[None, :] - PAD, 0, L - 1)   # (L, K)
    A = jax.nn.one_hot(src, L, dtype=jnp.float32).sum(axis=1) / KERNEL_SIZE
    return A                                                              # (L, L)


def _pick_tile_n(L, N):
    """Lane-axis tile: multiple of 128 dividing N if possible, VMEM-budgeted."""
    if N % 128 != 0:
        return N                                 # full extent (exception rule)
    best = 128
    # ~6 live f32 arrays of (L, tile_n) (x, trend, seasonal, e, partials, out);
    # keep well under the v7x 32 MiB default scoped limit.
    budget = 16 * 1024 * 1024
    for t in (256, 512, 1024, 2048, 4096):
        if N % t == 0 and 6 * L * t * 4 <= budget:
            best = t
    return best


def dfn_forward(x, alphas, alphas_2):
    """x: (B, L, C) float32. alphas, alphas_2: (n_func, 1, N_OPS)."""
    B, L, C = x.shape
    N = B * C

    # Layout plumbing: lane-dense (L, B*C) slab, time on sublanes.
    xt = jnp.transpose(x, (1, 0, 2)).reshape(L, N)

    # Banded averaging matrix with replicate padding baked in (no padded copy).
    A = _avg_matrix(L)

    # Glue: temperature_softmax over each alpha row, combined across n_func.
    ws = jnp.sum(jax.nn.softmax(alphas, axis=-1), axis=(0, 1)).astype(jnp.float32)
    wt = jnp.sum(jax.nn.softmax(alphas_2, axis=-1), axis=(0, 1)).astype(jnp.float32)

    tile_n = _pick_tile_n(L, N)
    grid = (N // tile_n,)

    grid_spec = pl.GridSpec(
        grid=grid,
        in_specs=[
            pl.BlockSpec(memory_space=pltpu.MemorySpace.SMEM),      # ws
            pl.BlockSpec(memory_space=pltpu.MemorySpace.SMEM),      # wt
            pl.BlockSpec((L, L), lambda n: (0, 0)),                 # A (resident)
            pl.BlockSpec((L, tile_n), lambda n: (0, n)),            # x slab
        ],
        out_specs=pl.BlockSpec((L, tile_n), lambda n: (0, n)),
    )

    out = pl.pallas_call(
        _dfn_kernel,
        out_shape=jax.ShapeDtypeStruct((L, N), x.dtype),
        grid_spec=grid_spec,
        compiler_params=pltpu.CompilerParams(
            dimension_semantics=("parallel",),
            vmem_limit_bytes=64 * 1024 * 1024,
        ),
    )(ws, wt, A, xt)

    # Back to the PyTorch (B, L, C) layout.
    return out.reshape(L, B, C).transpose(1, 0, 2)


def _reference(x, alphas, alphas_2):
    """Pure-JAX reference of the same forward, for correctness check."""
    B, L, C = x.shape
    front = jnp.repeat(x[:, 0:1, :], PAD, axis=1)
    end = jnp.repeat(x[:, -1:, :], PAD, axis=1)
    xp = jnp.concatenate([front, x, end], axis=1)
    idx = jnp.arange(L)[:, None] + jnp.arange(KERNEL_SIZE)[None, :]
    trend = jnp.mean(xp[:, idx, :], axis=2)                 # (B, L, C)
    seasonal = x - trend
    ws = jnp.sum(jax.nn.softmax(alphas, axis=-1), axis=(0, 1))
    wt = jnp.sum(jax.nn.softmax(alphas_2, axis=-1), axis=(0, 1))

    def mixed(z, w):
        ops = [z, z * z, jnp.tanh(z), jax.nn.sigmoid(z),
               jnp.maximum(z, 0.0), jnp.exp(z)]
        return sum(w[j] * ops[j] for j in range(N_OPS))

    return mixed(seasonal, ws) + mixed(trend, wt)


if __name__ == "__main__":
    key = jax.random.PRNGKey(0)
    B, L, C = 2, 48, 4        # batch, seq_len (in_length), channels
    n_func = 3

    x = jax.random.normal(key, (B, L, C), dtype=jnp.float32)

    # Deterministic parameter init, exactly as DFNModel.initialize_alphas:
    # n_func tensors of shape (1, len(flist)) = ones / len(flist).
    alphas = jnp.ones((n_func, 1, N_OPS), jnp.float32) / N_OPS
    alphas_2 = jnp.ones((n_func, 1, N_OPS), jnp.float32) / N_OPS

    out = jax.block_until_ready(dfn_forward(x, alphas, alphas_2))
    ref = _reference(x, alphas, alphas_2)

    assert out.shape == (B, L, C), out.shape
    assert jnp.allclose(out, ref, atol=1e-4, rtol=1e-4), "mismatch vs reference"
    print("KERNEL_OK")
</pallas_src>

<mosaic_0001>
module attributes {stable_mosaic.version = 11 : i64} {
  func.func @_dfn_kernel(%arg0: i32, %arg1: memref<6xf32, #tpu.memory_space<smem>>, %arg2: memref<6xf32, #tpu.memory_space<smem>>, %arg3: memref<48x48xf32, #tpu.memory_space<vmem>>, %arg4: memref<48x8xf32, #tpu.memory_space<vmem>>, %arg5: memref<48x8xf32, #tpu.memory_space<vmem>>) attributes {dimension_semantics = [#tpu.dimension_semantics<parallel>], iteration_bounds = array<i64: 1>, scalar_prefetch = 0 : i64, scratch_operands = 0 : i64, tpu.core_type = #tpu.core_type<tc>, window_params = [{transform_indices = @transform_0, window_bounds = array<i64: 6>}, {transform_indices = @transform_1, window_bounds = array<i64: 6>}, {pipeline_mode = #tpu.pipeline_mode<synchronous>, transform_indices = @transform_2, window_bounds = array<i64: 48, 48>}, {transform_indices = @transform_3, window_bounds = array<i64: 48, 8>}, {transform_indices = @transform_4, window_bounds = array<i64: 48, 8>}]} {
    %c0 = arith.constant 0 : index
    %c0_0 = arith.constant 0 : index
    %0 = vector.load %arg4[%c0, %c0_0] : memref<48x8xf32, #tpu.memory_space<vmem>>, vector<48x8xf32>
    %c0_1 = arith.constant 0 : index
    %c0_2 = arith.constant 0 : index
    %1 = vector.load %arg3[%c0_1, %c0_2] : memref<48x48xf32, #tpu.memory_space<vmem>>, vector<48x48xf32>
    %cst = arith.constant dense<0.000000e+00> : vector<48x8xf32>
    %2 = tpu.matmul %1, %0, %cst {dimension_numbers = #tpu.dot_dimension_numbers<[1], [0], [0], [1], [0, 0, 1, 1], [], []>} : vector<48x48xf32>, vector<48x8xf32>, vector<48x8xf32> -> vector<48x8xf32>
    %3 = arith.subf %0, %2 : vector<48x8xf32>
    %4 = math.exp %3 : vector<48x8xf32>
    %c0_3 = arith.constant 0 : index
    %5 = memref.load %arg1[%c0_3] : memref<6xf32, #tpu.memory_space<smem>>
    %6 = vector.broadcast %5 : f32 to vector<48x8xf32>
    %7 = arith.mulf %6, %3 : vector<48x8xf32>
    %c1 = arith.constant 1 : index
    %8 = memref.load %arg1[%c1] : memref<6xf32, #tpu.memory_space<smem>>
    %9 = arith.mulf %3, %3 : vector<48x8xf32>
    %10 = vector.broadcast %8 : f32 to vector<48x8xf32>
    %11 = arith.mulf %10, %9 : vector<48x8xf32>
    %12 = arith.addf %7, %11 : vector<48x8xf32>
    %c2 = arith.constant 2 : index
    %13 = memref.load %arg1[%c2] : memref<6xf32, #tpu.memory_space<smem>>
    %14 = math.tanh %3 : vector<48x8xf32>
    %15 = vector.broadcast %13 : f32 to vector<48x8xf32>
    %16 = arith.mulf %15, %14 : vector<48x8xf32>
    %17 = arith.addf %12, %16 : vector<48x8xf32>
    %c3 = arith.constant 3 : index
    %18 = memref.load %arg1[%c3] : memref<6xf32, #tpu.memory_space<smem>>
    %cst_4 = arith.constant 1.000000e+00 : f32
    %19 = vector.broadcast %cst_4 : f32 to vector<48x8xf32>
    %20 = arith.addf %19, %4 : vector<48x8xf32>
    %21 = arith.divf %4, %20 : vector<48x8xf32>
    %22 = vector.broadcast %18 : f32 to vector<48x8xf32>
    %23 = arith.mulf %22, %21 : vector<48x8xf32>
    %24 = arith.addf %17, %23 : vector<48x8xf32>
    %c4 = arith.constant 4 : index
    %25 = memref.load %arg1[%c4] : memref<6xf32, #tpu.memory_space<smem>>
    %cst_5 = arith.constant 0.000000e+00 : f32
    %26 = vector.broadcast %cst_5 : f32 to vector<48x8xf32>
    %27 = arith.maximumf %3, %26 : vector<48x8xf32>
    %28 = vector.broadcast %25 : f32 to vector<48x8xf32>
    %29 = arith.mulf %28, %27 : vector<48x8xf32>
    %30 = arith.addf %24, %29 : vector<48x8xf32>
    %c5 = arith.constant 5 : index
    %31 = memref.load %arg1[%c5] : memref<6xf32, #tpu.memory_space<smem>>
    %32 = vector.broadcast %31 : f32 to vector<48x8xf32>
    %33 = arith.mulf %32, %4 : vector<48x8xf32>
    %34 = arith.addf %30, %33 : vector<48x8xf32>
    %35 = math.exp %2 : vector<48x8xf32>
    %c0_6 = arith.constant 0 : index
    %36 = memref.load %arg2[%c0_6] : memref<6xf32, #tpu.memory_space<smem>>
    %37 = vector.broadcast %36 : f32 to vector<48x8xf32>
    %38 = arith.mulf %37, %2 : vector<48x8xf32>
    %c1_7 = arith.constant 1 : index
    %39 = memref.load %arg2[%c1_7] : memref<6xf32, #tpu.memory_space<smem>>
    %40 = arith.mulf %2, %2 : vector<48x8xf32>
    %41 = vector.broadcast %39 : f32 to vector<48x8xf32>
    %42 = arith.mulf %41, %40 : vector<48x8xf32>
    %43 = arith.addf %38, %42 : vector<48x8xf32>
    %c2_8 = arith.constant 2 : index
    %44 = memref.load %arg2[%c2_8] : memref<6xf32, #tpu.memory_space<smem>>
    %45 = math.tanh %2 : vector<48x8xf32>
    %46 = vector.broadcast %44 : f32 to vector<48x8xf32>
    %47 = arith.mulf %46, %45 : vector<48x8xf32>
    %48 = arith.addf %43, %47 : vector<48x8xf32>
    %c3_9 = arith.constant 3 : index
    %49 = memref.load %arg2[%c3_9] : memref<6xf32, #tpu.memory_space<smem>>
    %cst_10 = arith.constant 1.000000e+00 : f32
    %50 = vector.broadcast %cst_10 : f32 to vector<48x8xf32>
    %51 = arith.addf %50, %35 : vector<48x8xf32>
    %52 = arith.divf %35, %51 : vector<48x8xf32>
    %53 = vector.broadcast %49 : f32 to vector<48x8xf32>
    %54 = arith.mulf %53, %52 : vector<48x8xf32>
    %55 = arith.addf %48, %54 : vector<48x8xf32>
    %c4_11 = arith.constant 4 : index
    %56 = memref.load %arg2[%c4_11] : memref<6xf32, #tpu.memory_space<smem>>
    %cst_12 = arith.constant 0.000000e+00 : f32
    %57 = vector.broadcast %cst_12 : f32 to vector<48x8xf32>
    %58 = arith.maximumf %2, %57 : vector<48x8xf32>
    %59 = vector.broadcast %56 : f32 to vector<48x8xf32>
    %60 = arith.mulf %59, %58 : vector<48x8xf32>
    %61 = arith.addf %55, %60 : vector<48x8xf32>
    %c5_13 = arith.constant 5 : index
    %62 = memref.load %arg2[%c5_13] : memref<6xf32, #tpu.memory_space<smem>>
    %63 = vector.broadcast %62 : f32 to vector<48x8xf32>
    %64 = arith.mulf %63, %35 : vector<48x8xf32>
    %65 = arith.addf %61, %64 : vector<48x8xf32>
    %66 = arith.addf %34, %65 : vector<48x8xf32>
    %c0_14 = arith.constant 0 : index
    %c0_15 = arith.constant 0 : index
    %67 = vector.load %arg5[%c0_14, %c0_15] : memref<48x8xf32, #tpu.memory_space<vmem>>, vector<48x8xf32>
    tpu.vector_store %arg5[%c0_14, %c0_15], %66 {strides = array<i32>} : memref<48x8xf32, #tpu.memory_space<vmem>>, vector<48x8xf32>,
    return
  }
  func.func @transform_0(%arg0: i32) -> i32 {
    %c0_i32 = arith.constant 0 : i32
    %c0_i32_0 = arith.constant 0 : i32
    return %c0_i32 : i32
  }
  func.func @transform_1(%arg0: i32) -> i32 {
    %c0_i32 = arith.constant 0 : i32
    %c0_i32_0 = arith.constant 0 : i32
    return %c0_i32 : i32
  }
  func.func @transform_2(%arg0: i32) -> (i32, i32) {
    %c0_i32 = arith.constant 0 : i32
    %c0_i32_0 = arith.constant 0 : i32
    %c0_i32_1 = arith.constant 0 : i32
    return %c0_i32, %c0_i32_0 : i32, i32
  }
  func.func @transform_3(%arg0: i32) -> (i32, i32) {
    %c0_i32 = arith.constant 0 : i32
    %c0_i32_0 = arith.constant 0 : i32
    return %c0_i32, %arg0 : i32, i32
  }
  func.func @transform_4(%arg0: i32) -> (i32, i32) {
    %c0_i32 = arith.constant 0 : i32
    %c0_i32_0 = arith.constant 0 : i32
    return %c0_i32, %arg0 : i32, i32
  }
}

</mosaic_0001>

<llo_original>
// kernel: tpu_custom_call.1
$region0: #{tpu_custom_call.1}
  #allocation0 [shape = 'u32[]', space=smem, size = 0x4, offset = 0x4, fixed_abs, tag = 'smem constant byte address 0x4 - core index']
  #allocation1 [shape = 'u32[144,128]{1,0:T(1,128)}', space=vmem, size = 0x12000, scoped, tag = 'internal scratch']
  %s0 = inlined_call_operand.hbm [shape: f32[6], index: 0, kind: input, shape index: {}]
  %s1 = inlined_call_operand.hbm [shape: f32[6], index: 1, kind: input, shape index: {}]
  %s2 = inlined_call_operand.hbm [shape: f32[48,48], index: 2, kind: input, shape index: {}]
  %s3 = inlined_call_operand.hbm [shape: f32[48,8], index: 3, kind: input, shape index: {}]
  %s4 = inlined_call_operand.hbm [shape: f32[48,8], index: 4, kind: output, shape index: {}]
  %s5 = sld [smem:[#allocation0]]
  $region42: #{tpu_custom_call.1} parent=0
    _
  %s7 = ssub.s32 1, %s5
  %s8 = scalar_select 0, %s7, %s5
  $region1: #{tpu_custom_call.1} parent=0
    #allocation2 [shape = 'u8[512]{0}', space=smem, size = 0x200, scoped, tag = 'input window, operand 0, single buffered']
    #allocation3 [shape = 's32[1]{0}', space=sflag, size = 0x4, scoped, tag = 'scoped memory for tpu_custom_call.1']
    #allocation4 [shape = 's32[1]{0}', space=sflag, size = 0x4, scoped, tag = 'scoped memory for tpu_custom_call.1']
    #allocation5 [shape = 's32[1]{0}', space=sflag, size = 0x4, scoped, tag = 'scoped memory for tpu_custom_call.1']
    #allocation6 [shape = 'u8[512]{0}', space=smem, size = 0x200, scoped, tag = 'input window, operand 1, single buffered']
    #allocation7 [shape = 's32[1]{0}', space=sflag, size = 0x4, scoped, tag = 'scoped memory for tpu_custom_call.1']
    #allocation8 [shape = 'u8[24576]{0}', space=vmem, size = 0x6000, scoped, tag = 'input window, operand 2, single buffered']
    #allocation9 [shape = 'u8[24576]{0}', space=vmem, size = 0x6000, scoped, tag = 'input window, operand 3, single buffered']
    #allocation10 [shape = 's32[1]{0}', space=sflag, size = 0x4, scoped, tag = 'scoped memory for tpu_custom_call.1']
    #allocation11 [shape = 'u8[24576]{0}', space=vmem, size = 0x6000, scoped, tag = 'output window, operand 0, single buffered']
    %9 = vsyncpa [#allocation5], 0
    %10 = vsyncpa [#allocation7], 0
    %11 = vsyncpa [#allocation3], 0
    %12 = vsyncpa [#allocation10], 0
    %13 = vsyncpa [#allocation4], 0
    // Predicated region
    $region2: #{tpu_custom_call.1} parent=1 // pred_check
      _
    $region3: #{tpu_custom_call.1} parent=1 // pred_check_branch
      %15 = sbr.rel (0) target = $region5
    $region4: #{tpu_custom_call.1} parent=1 // pred_region
      %s17 = ssub.s32 16, 16
      %18 = vsyncadd [#allocation5], %s17
      %21 = dma.hbm_to_smem %s0, 16, [#allocation2], [#allocation5]
    $region5: #{tpu_custom_call.1} parent=1 // pred_fallthru
      _
    // Predicated region
    $region6: #{tpu_custom_call.1} parent=1 // pred_check
      _
    $region7: #{tpu_custom_call.1} parent=1 // pred_check_branch
      %23 = sbr.rel (0) target = $region9
    $region8: #{tpu_custom_call.1} parent=1 // pred_region
      %s25 = ssub.s32 16, 16
      %26 = vsyncadd [#allocation7], %s25
      %29 = dma.hbm_to_smem %s1, 16, [#allocation6], [#allocation7]
    $region9: #{tpu_custom_call.1} parent=1 // pred_fallthru
      _
    // Predicated region
    $region10: #{tpu_custom_call.1} parent=1 // pred_check
      _
    $region11: #{tpu_custom_call.1} parent=1 // pred_check_branch
      %31 = sbr.rel (0) target = $region13
    $region12: #{tpu_custom_call.1} parent=1 // pred_region
      %s33 = ssub.s32 768, 768
      %34 = vsyncadd [#allocation3], %s33
      %s35 = sshll.u32 [#allocation8], 4
      %s36 = int_to_ptr.vmem [resolvable:$true] %s35
      %41 = dma.hbm_to_vmem [thread:$0]  %s2, 768, %s36, [#allocation3], 128, 128, 8
    $region13: #{tpu_custom_call.1} parent=1 // pred_fallthru
      _
    // Predicated region
    $region14: #{tpu_custom_call.1} parent=1 // pred_check
      _
    $region15: #{tpu_custom_call.1} parent=1 // pred_check_branch
      %43 = sbr.rel (0) target = $region17
    $region16: #{tpu_custom_call.1} parent=1 // pred_region
      %s45 = ssub.s32 768, 768
      %46 = vsyncadd [#allocation10], %s45
      %s47 = sshll.u32 [#allocation9], 4
      %s48 = int_to_ptr.vmem [resolvable:$true] %s47
      %53 = dma.hbm_to_vmem [thread:$0]  %s3, 768, %s48, [#allocation10], 128, 128, 8
    $region17: #{tpu_custom_call.1} parent=1 // pred_fallthru
      _
    // Predicated region
    $region18: #{tpu_custom_call.1} parent=1 // pred_check
      _
    $region19: #{tpu_custom_call.1} parent=1 // pred_check_branch
      %55 = sbr.rel (0) target = $region21
    $region20: #{tpu_custom_call.1} parent=1 // pred_region
      %56 = dma.done [#allocation5], 16
    $region21: #{tpu_custom_call.1} parent=1 // pred_fallthru
      _
    // Predicated region
    $region22: #{tpu_custom_call.1} parent=1 // pred_check
      _
    $region23: #{tpu_custom_call.1} parent=1 // pred_check_branch
      %58 = sbr.rel (0) target = $region25
    $region24: #{tpu_custom_call.1} parent=1 // pred_region
      %59 = dma.done [#allocation7], 16
    $region25: #{tpu_custom_call.1} parent=1 // pred_fallthru
      _
    // Predicated region
    $region26: #{tpu_custom_call.1} parent=1 // pred_check
      _
    $region27: #{tpu_custom_call.1} parent=1 // pred_check_branch
      %61 = sbr.rel (0) target = $region29
    $region28: #{tpu_custom_call.1} parent=1 // pred_region
      %62 = dma.done [#allocation3], 768
    $region29: #{tpu_custom_call.1} parent=1 // pred_fallthru
      _
    // Predicated region
    $region30: #{tpu_custom_call.1} parent=1 // pred_check
      _
    $region31: #{tpu_custom_call.1} parent=1 // pred_check_branch
      %64 = sbr.rel (0) target = $region33
    $region32: #{tpu_custom_call.1} parent=1 // pred_region
      %65 = dma.done [#allocation10], 768
    $region33: #{tpu_custom_call.1} parent=1 // pred_fallthru
      _
    %66 = sfence
    %v67 = vld [vmem:[#allocation9] sm:$0xff]
    %v68 = vld [vmem:[#allocation9 + $0x8] sm:$0xff]
    %v69 = vld [vmem:[#allocation9 + $0x10] sm:$0xff]
    %v70 = vld [vmem:[#allocation9 + $0x18] sm:$0xff]
    %v71 = vld [vmem:[#allocation9 + $0x20] sm:$0xff]
    %v72 = vld [vmem:[#allocation9 + $0x28] sm:$0xff]
    %v73 = vld [vmem:[#allocation8] sm:$0xff]
    %v74 = vld [vmem:[#allocation8 + $0x8] sm:$0xff]
    %v75 = vld [vmem:[#allocation8 + $0x10] sm:$0xff]
    %v76 = vld [vmem:[#allocation8 + $0x18] sm:$0xff]
    %v77 = vld [vmem:[#allocation8 + $0x20] sm:$0xff]
    %v78 = vld [vmem:[#allocation8 + $0x28] sm:$0xff]
    %vm79 = vcmask 392192
    %v81 = vsel %vm79, %v73, 0
    %v84 = vsel %vm79, %v74, 0
    %v87 = vsel %vm79, %v75, 0
    %v90 = vsel %vm79, %v76, 0
    %v93 = vsel %vm79, %v77, 0
    %v96 = vsel %vm79, %v78, 0
    %98 = vmatprep.subr.mxu0 0.0
    %99 = vmatpush1.msra.mxu0 %v67
    %100 = vmatprep.subr.mxu0 0.0
    %101 = vmatpush1.msra.mxu0 %v68
    %102 = vmatprep.subr.mxu0 0.0
    %103 = vmatpush1.msra.mxu0 %v69
    %104 = vmatprep.subr.mxu0 0.0
    %105 = vmatpush1.msra.mxu0 %v70
    %106 = vmatprep.subr.mxu0 0.0
    %107 = vmatpush1.msra.mxu0 %v71
    %108 = vmatprep.subr.mxu0 0.0
    %109 = vmatpush1.msra.mxu0 %v72
    %110 = vmatprep.subr.mxu0 0.0
    %111 = vmatpush1.msra.mxu0 0.0
    %112 = vmatprep.subr.mxu0 0.0
    %113 = vmatpush1.msra.mxu0 0.0
    %114 = vmatprep.subr.mxu0 0.0
    %115 = vmatpush1.msra.mxu0 0.0
    %116 = vmatprep.subr.mxu0 0.0
    %117 = vmatpush1.msra.mxu0 0.0
    %118 = vmatprep.subr.mxu0 0.0
    %119 = vmatpush1.msra.mxu0 0.0
    %120 = vmatprep.subr.mxu0 0.0
    %121 = vmatpush1.msra.mxu0 0.0
    %122 = vmatprep.subr.mxu0 0.0
    %123 = vmatpush1.msra.mxu0 0.0
    %124 = vmatprep.subr.mxu0 0.0
    %125 = vmatpush1.msra.mxu0 0.0
    %126 = vmatprep.subr.mxu0 0.0
    %127 = vmatpush1.msra.mxu0 0.0
    %128 = vmatprep.subr.mxu0 0.0
    %129 = vmatpush1.msra.mxu0 0.0
    %130 = vmatprep.subr.mxu0 0.0
    %131 = vmatpush1.msra.mxu0 0.0
    %132 = vmatprep.subr.mxu0 0.0
    %133 = vmatpush1.msra.mxu0 0.0
    %134 = vmatprep.subr.mxu0 0.0
    %135 = vmatpush1.msra.mxu0 0.0
    %136 = vmatprep.subr.mxu0 0.0
    %137 = vmatpush1.msra.mxu0 0.0
    %138 = vmatprep.subr.mxu0 0.0
    %139 = vmatpush1.msra.mxu0 0.0
    %140 = vmatprep.subr.mxu0 0.0
    %141 = vmatpush1.msra.mxu0 0.0
    %142 = vmatprep.subr.mxu0 0.0
    %143 = vmatpush1.msra.mxu0 0.0
    %144 = vmatprep.subr.mxu0 0.0
    %145 = vmatpush1.msra.mxu0 0.0
    %146 = vmatprep.subr.mxu0 0.0
    %147 = vmatpush1.msra.mxu0 0.0
    %148 = vmatprep.subr.mxu0 0.0
    %149 = vmatpush1.msra.mxu0 0.0
    %150 = vmatprep.subr.mxu0 0.0
    %151 = vmatpush1.msra.mxu0 0.0
    %152 = vmatprep.subr.mxu0 0.0
    %153 = vmatpush1.msra.mxu0 0.0
    %154 = vmatprep.subr.mxu0 0.0
    %155 = vmatpush1.msra.mxu0 0.0
    %156 = vmatprep.subr.mxu0 0.0
    %157 = vmatpush1.msra.mxu0 0.0
    %158 = vmatprep.subr.mxu0 0.0
    %159 = vmatpush1.msra.mxu0 0.0
    %160 = vmatprep.subr.mxu0 0.0
    %161 = vmatpush1.msra.mxu0 0.0
    %162 = vmatprep.mubr.f32.mxu0 0.0
    %163 = vmatmul.mubr.f32.gmra.mrb[0].mxu0 %v81
    %v164 = vpop.f32.mrb[0].mxu0
    %v165 = vadd.f32 0.0, %v164
    %v166 = vpop.f32.mrb[0].mxu0
    %167 = vmatprep.mubr.f32.mxu0 0.0
    %168 = vmatmul.mubr.f32.gmra.mrb[0].mxu0 %v84
    %v169 = vpop.f32.mrb[0].mxu0
    %v170 = vadd.f32 0.0, %v169
    %v171 = vpop.f32.mrb[0].mxu0
    %172 = vmatprep.mubr.f32.mxu0 0.0
    %173 = vmatmul.mubr.f32.gmra.mrb[0].mxu0 %v87
    %v174 = vpop.f32.mrb[0].mxu0
    %v175 = vadd.f32 0.0, %v174
    %v176 = vpop.f32.mrb[0].mxu0
    %177 = vmatprep.mubr.f32.mxu0 0.0
    %178 = vmatmul.mubr.f32.gmra.mrb[0].mxu0 %v90
    %v179 = vpop.f32.mrb[0].mxu0
    %v180 = vadd.f32 0.0, %v179
    %v181 = vpop.f32.mrb[0].mxu0
    %182 = vmatprep.mubr.f32.mxu0 0.0
    %183 = vmatmul.mubr.f32.gmra.mrb[0].mxu0 %v93
    %v184 = vpop.f32.mrb[0].mxu0
    %v185 = vadd.f32 0.0, %v184
    %v186 = vpop.f32.mrb[0].mxu0
    %187 = vmatprep.mubr.f32.mxu0 0.0
    %188 = vmatmul.mubr.f32.gmra.mrb[0].mxu0 %v96
    %v189 = vpop.f32.mrb[0].mxu0
    %v190 = vadd.f32 0.0, %v189
    %v191 = vpop.f32.mrb[0].mxu0
    %192 = vdwg.mxu0
    %v193 = vsub.f32 %v67, %v165
    %v194 = vsub.f32 %v68, %v170
    %v195 = vsub.f32 %v69, %v175
    %v196 = vsub.f32 %v70, %v180
    %v197 = vsub.f32 %v71, %v185
    %v198 = vsub.f32 %v72, %v190
    %v199 = vmul.f32 %v193, 1.442695
    %v200 = vpow.pop %v199
    %v201 = vmul.f32 %v194, 1.442695
    %v202 = vpow.pop %v201
    %v203 = vmul.f32 %v195, 1.442695
    %v204 = vpow.pop %v203
    %v205 = vmul.f32 %v196, 1.442695
    %v206 = vpow.pop %v205
    %v207 = vmul.f32 %v197, 1.442695
    %v208 = vpow.pop %v207
    %v209 = vmul.f32 %v198, 1.442695
    %v210 = vpow.pop %v209
    %s211 = sld [smem:[#allocation2]]
    %v212 = vstv %s211
    %v213 = vmul.f32 %v212, %v193
    %v214 = vmul.f32 %v212, %v194
    %v215 = vmul.f32 %v212, %v195
    %v216 = vmul.f32 %v212, %v196
    %v217 = vmul.f32 %v212, %v197
    %v218 = vmul.f32 %v212, %v198
    %s219 = sld [smem:[#allocation2 + $0x1]]
    %v220 = vmul.f32 %v193, %v193
    %v221 = vmul.f32 %v194, %v194
    %v222 = vmul.f32 %v195, %v195
    %v223 = vmul.f32 %v196, %v196
    %v224 = vmul.f32 %v197, %v197
    %v225 = vmul.f32 %v198, %v198
    %v226 = vstv %s219
    %v227 = vmul.f32 %v226, %v220
    %v228 = vmul.f32 %v226, %v221
    %v229 = vmul.f32 %v226, %v222
    %v230 = vmul.f32 %v226, %v223
    %v231 = vmul.f32 %v226, %v224
    %v232 = vmul.f32 %v226, %v225
    %v233 = vadd.f32 %v213, %v227
    %v234 = vadd.f32 %v214, %v228
    %v235 = vadd.f32 %v215, %v229
    %v236 = vadd.f32 %v216, %v230
    %v237 = vadd.f32 %v217, %v231
    %v238 = vadd.f32 %v218, %v232
    %s239 = sld [smem:[#allocation2 + $0x2]]
    %v240 = vtanh.pop %v193
    %v241 = vtanh.pop %v194
    %v242 = vtanh.pop %v195
    %v243 = vtanh.pop %v196
    %v244 = vtanh.pop %v197
    %v245 = vtanh.pop %v198
    %v246 = vstv %s239
    %v247 = vmul.f32 %v246, %v240
    %v248 = vmul.f32 %v246, %v241
    %v249 = vmul.f32 %v246, %v242
    %v250 = vmul.f32 %v246, %v243
    %v251 = vmul.f32 %v246, %v244
    %v252 = vmul.f32 %v246, %v245
    %v253 = vadd.f32 %v233, %v247
    %v254 = vadd.f32 %v234, %v248
    %v255 = vadd.f32 %v235, %v249
    %v256 = vadd.f32 %v236, %v250
    %v257 = vadd.f32 %v237, %v251
    %v258 = vadd.f32 %v238, %v252
    %s259 = sld [smem:[#allocation2 + $0x3]]
    %v260 = vadd.f32 %v200, 1.0
    %v261 = vadd.f32 %v202, 1.0
    %v262 = vadd.f32 %v204, 1.0
    %v263 = vadd.f32 %v206, 1.0
    %v264 = vadd.f32 %v208, 1.0
    %v265 = vadd.f32 %v210, 1.0
    %v266 = vrcp.pop %v260
    %v267 = vmul.f32 %v200, %v266
    %v268 = vrcp.pop %v261
    %v269 = vmul.f32 %v202, %v268
    %v270 = vrcp.pop %v262
    %v271 = vmul.f32 %v204, %v270
    %v272 = vrcp.pop %v263
    %v273 = vmul.f32 %v206, %v272
    %v274 = vrcp.pop %v264
    %v275 = vmul.f32 %v208, %v274
    %v276 = vrcp.pop %v265
    %v277 = vmul.f32 %v210, %v276
    %v278 = vstv %s259
    %v279 = vmul.f32 %v278, %v267
    %v280 = vmul.f32 %v278, %v269
    %v281 = vmul.f32 %v278, %v271
    %v282 = vmul.f32 %v278, %v273
    %v283 = vmul.f32 %v278, %v275
    %v284 = vmul.f32 %v278, %v277
    %v285 = vadd.f32 %v253, %v279
    %v286 = vadd.f32 %v254, %v280
    %v287 = vadd.f32 %v255, %v281
    %v288 = vadd.f32 %v256, %v282
    %v289 = vadd.f32 %v257, %v283
    %v290 = vadd.f32 %v258, %v284
    %s291 = sld [smem:[#allocation2 + $0x4]]
    %v292 = vmax.f32 %v193, 0.0
    %v293 = vmax.f32 %v194, 0.0
    %v294 = vmax.f32 %v195, 0.0
    %v295 = vmax.f32 %v196, 0.0
    %v296 = vmax.f32 %v197, 0.0
    %v297 = vmax.f32 %v198, 0.0
    %v298 = vstv %s291
    %v299 = vmul.f32 %v298, %v292
    %v300 = vmul.f32 %v298, %v293
    %v301 = vmul.f32 %v298, %v294
    %v302 = vmul.f32 %v298, %v295
    %v303 = vmul.f32 %v298, %v296
    %v304 = vmul.f32 %v298, %v297
    %v305 = vadd.f32 %v285, %v299
    %v306 = vadd.f32 %v286, %v300
    %v307 = vadd.f32 %v287, %v301
    %v308 = vadd.f32 %v288, %v302
    %v309 = vadd.f32 %v289, %v303
    %v310 = vadd.f32 %v290, %v304
    %s311 = sld [smem:[#allocation2 + $0x5]]
    %v312 = vstv %s311
    %v313 = vmul.f32 %v312, %v200
    %v314 = vmul.f32 %v312, %v202
    %v315 = vmul.f32 %v312, %v204
    %v316 = vmul.f32 %v312, %v206
    %v317 = vmul.f32 %v312, %v208
    %v318 = vmul.f32 %v312, %v210
    %v319 = vadd.f32 %v305, %v313
    %v320 = vadd.f32 %v306, %v314
    %v321 = vadd.f32 %v307, %v315
    %v322 = vadd.f32 %v308, %v316
    %v323 = vadd.f32 %v309, %v317
    %v324 = vadd.f32 %v310, %v318
    %v325 = vmul.f32 %v165, 1.442695
    %v326 = vpow.pop %v325
    %v327 = vmul.f32 %v170, 1.442695
    %v328 = vpow.pop %v327
    %v329 = vmul.f32 %v175, 1.442695
    %v330 = vpow.pop %v329
    %v331 = vmul.f32 %v180, 1.442695
    %v332 = vpow.pop %v331
    %v333 = vmul.f32 %v185, 1.442695
    %v334 = vpow.pop %v333
    %v335 = vmul.f32 %v190, 1.442695
    %v336 = vpow.pop %v335
    %s337 = sld [smem:[#allocation6]]
    %v338 = vstv %s337
    %v339 = vmul.f32 %v338, %v165
    %v340 = vmul.f32 %v338, %v170
    %v341 = vmul.f32 %v338, %v175
    %v342 = vmul.f32 %v338, %v180
    %v343 = vmul.f32 %v338, %v185
    %v344 = vmul.f32 %v338, %v190
    %s345 = sld [smem:[#allocation6 + $0x1]]
    %v346 = vmul.f32 %v165, %v165
    %v347 = vmul.f32 %v170, %v170
    %v348 = vmul.f32 %v175, %v175
    %v349 = vmul.f32 %v180, %v180
    %v350 = vmul.f32 %v185, %v185
    %v351 = vmul.f32 %v190, %v190
    %v352 = vstv %s345
    %v353 = vmul.f32 %v352, %v346
    %v354 = vmul.f32 %v352, %v347
    %v355 = vmul.f32 %v352, %v348
    %v356 = vmul.f32 %v352, %v349
    %v357 = vmul.f32 %v352, %v350
    %v358 = vmul.f32 %v352, %v351
    %v359 = vadd.f32 %v339, %v353
    %v360 = vadd.f32 %v340, %v354
    %v361 = vadd.f32 %v341, %v355
    %v362 = vadd.f32 %v342, %v356
    %v363 = vadd.f32 %v343, %v357
    %v364 = vadd.f32 %v344, %v358
    %s365 = sld [smem:[#allocation6 + $0x2]]
    %v366 = vtanh.pop %v165
    %v367 = vtanh.pop %v170
    %v368 = vtanh.pop %v175
    %v369 = vtanh.pop %v180
    %v370 = vtanh.pop %v185
    %v371 = vtanh.pop %v190
    %v372 = vstv %s365
    %v373 = vmul.f32 %v372, %v366
    %v374 = vmul.f32 %v372, %v367
    %v375 = vmul.f32 %v372, %v368
    %v376 = vmul.f32 %v372, %v369
    %v377 = vmul.f32 %v372, %v370
    %v378 = vmul.f32 %v372, %v371
    %v379 = vadd.f32 %v359, %v373
    %v380 = vadd.f32 %v360, %v374
    %v381 = vadd.f32 %v361, %v375
    %v382 = vadd.f32 %v362, %v376
    %v383 = vadd.f32 %v363, %v377
    %v384 = vadd.f32 %v364, %v378
    %s385 = sld [smem:[#allocation6 + $0x3]]
    %v386 = vadd.f32 %v326, 1.0
    %v387 = vadd.f32 %v328, 1.0
    %v388 = vadd.f32 %v330, 1.0
    %v389 = vadd.f32 %v332, 1.0
    %v390 = vadd.f32 %v334, 1.0
    %v391 = vadd.f32 %v336, 1.0
    %v392 = vrcp.pop %v386
    %v393 = vmul.f32 %v326, %v392
    %v394 = vrcp.pop %v387
    %v395 = vmul.f32 %v328, %v394
    %v396 = vrcp.pop %v388
    %v397 = vmul.f32 %v330, %v396
    %v398 = vrcp.pop %v389
    %v399 = vmul.f32 %v332, %v398
    %v400 = vrcp.pop %v390
    %v401 = vmul.f32 %v334, %v400
    %v402 = vrcp.pop %v391
    %v403 = vmul.f32 %v336, %v402
    %v404 = vstv %s385
    %v405 = vmul.f32 %v404, %v393
    %v406 = vmul.f32 %v404, %v395
    %v407 = vmul.f32 %v404, %v397
    %v408 = vmul.f32 %v404, %v399
    %v409 = vmul.f32 %v404, %v401
    %v410 = vmul.f32 %v404, %v403
    %v411 = vadd.f32 %v379, %v405
    %v412 = vadd.f32 %v380, %v406
    %v413 = vadd.f32 %v381, %v407
    %v414 = vadd.f32 %v382, %v408
    %v415 = vadd.f32 %v383, %v409
    %v416 = vadd.f32 %v384, %v410
    %s417 = sld [smem:[#allocation6 + $0x4]]
    %v418 = vmax.f32 %v165, 0.0
    %v419 = vmax.f32 %v170, 0.0
    %v420 = vmax.f32 %v175, 0.0
    %v421 = vmax.f32 %v180, 0.0
    %v422 = vmax.f32 %v185, 0.0
    %v423 = vmax.f32 %v190, 0.0
    %v424 = vstv %s417
    %v425 = vmul.f32 %v424, %v418
    %v426 = vmul.f32 %v424, %v419
    %v427 = vmul.f32 %v424, %v420
    %v428 = vmul.f32 %v424, %v421
    %v429 = vmul.f32 %v424, %v422
    %v430 = vmul.f32 %v424, %v423
    %v431 = vadd.f32 %v411, %v425
    %v432 = vadd.f32 %v412, %v426
    %v433 = vadd.f32 %v413, %v427
    %v434 = vadd.f32 %v414, %v428
    %v435 = vadd.f32 %v415, %v429
    %v436 = vadd.f32 %v416, %v430
    %s437 = sld [smem:[#allocation6 + $0x5]]
    %v438 = vstv %s437
    %v439 = vmul.f32 %v438, %v326
    %v440 = vmul.f32 %v438, %v328
    %v441 = vmul.f32 %v438, %v330
    %v442 = vmul.f32 %v438, %v332
    %v443 = vmul.f32 %v438, %v334
    %v444 = vmul.f32 %v438, %v336
    %v445 = vadd.f32 %v431, %v439
    %v446 = vadd.f32 %v432, %v440
    %v447 = vadd.f32 %v433, %v441
    %v448 = vadd.f32 %v434, %v442
    %v449 = vadd.f32 %v435, %v443
    %v450 = vadd.f32 %v436, %v444
    %v451 = vadd.f32 %v319, %v445
    %v452 = vadd.f32 %v320, %v446
    %v453 = vadd.f32 %v321, %v447
    %v454 = vadd.f32 %v322, %v448
    %v455 = vadd.f32 %v323, %v449
    %v456 = vadd.f32 %v324, %v450
    %vm457 = vcmask 64512
    %458 = vst.msk [vmem:[#allocation11] sm:$0xff] %vm457, %v451
    %459 = vst.msk [vmem:[#allocation11 + $0x8] sm:$0xff] %vm457, %v452
    %460 = vst.msk [vmem:[#allocation11 + $0x10] sm:$0xff] %vm457, %v453
    %461 = vst.msk [vmem:[#allocation11 + $0x18] sm:$0xff] %vm457, %v454
    %462 = vst.msk [vmem:[#allocation11 + $0x20] sm:$0xff] %vm457, %v455
    %463 = vst.msk [vmem:[#allocation11 + $0x28] sm:$0xff] %vm457, %v456
    // Predicated region
    $region34: #{tpu_custom_call.1} parent=1 // pred_check
      _
    $region35: #{tpu_custom_call.1} parent=1 // pred_check_branch
      %465 = sbr.rel (0) target = $region37
    $region36: #{tpu_custom_call.1} parent=1 // pred_region
      %s467 = ssub.s32 768, 768
      %468 = vsyncadd [#allocation4], %s467
      %s469 = sshll.u32 [#allocation11], 4
      %s470 = int_to_ptr.vmem [resolvable:$true] %s469
      %475 = dma.vmem_to_hbm [thread:$0]  %s470, 768, %s4, [#allocation4], 128, 128, 8
    $region37: #{tpu_custom_call.1} parent=1 // pred_fallthru
      _
    // Predicated region
    $region38: #{tpu_custom_call.1} parent=1 // pred_check
      _
    $region39: #{tpu_custom_call.1} parent=1 // pred_check_branch
      %477 = sbr.rel (0) target = $region41
    $region40: #{tpu_custom_call.1} parent=1 // pred_region
      %478 = dma.done [#allocation4], 768
    $region41: #{tpu_custom_call.1} parent=1 // pred_fallthru
      _
    %479 = vsyncpa [#allocation3], 1
    %480 = vsyncpa [#allocation10], 1
    %481 = vsyncpa [#allocation4], 1
    %482 = vsyncpa [#allocation5], 1
    %483 = vsyncpa [#allocation7], 1

</llo_original>
